<compile_context>
chip_gen: v6e
topology: v6e:2x2x1
jax: 0.10.0
libtpu: 0.0.40
codegen_flags: <defaults>
</compile_context>

<pallas_src>
import functools

import numpy as np
import jax
import jax.numpy as jnp
from jax.experimental import pallas as pl
from jax.experimental.pallas import tpu as pltpu


# ----------------------------------------------------------------------------
# Host-side (numpy) constants: the fixed filter and the expansion matrix.
# ----------------------------------------------------------------------------
def _make_bilinear_filt(stride):
    """1-D filter replicating the PyTorch make_bilinear_weights formula."""
    factor = (2 * stride - stride % 2) / (2.0 * stride)
    og = np.arange(stride, dtype=np.float32)
    return (1.0 - np.abs(og / factor - (stride - 1) / (2.0 * factor))).astype(np.float32)


def _make_expansion_matrix(W, stride, group):
    """Gg[r*W + w, r*(s*W*s) + i*(W*s) + w*s + j] = filt[i] * filt[j]."""
    filt = _make_bilinear_filt(stride)
    k2 = np.outer(filt, filt).astype(np.float32)            # (s, s)
    Ws = W * stride
    colw = stride * Ws                                        # output cols per input row
    Gg = np.zeros((group * W, group * colw), dtype=np.float32)
    ii = np.arange(stride)[:, None] * Ws
    jj = np.arange(stride)[None, :]
    for r in range(group):
        for w in range(W):
            Gg[r * W + w, r * colw + ii + w * stride + jj] = k2
    return Gg


# ----------------------------------------------------------------------------
# Kernel: one MXU matmul per grid step, lane-dense input and output slabs.
# ----------------------------------------------------------------------------
def _upsample_kernel(x_ref, g_ref, o_ref):
    # x_ref: (tm, group*W)            lane-dense input slab
    # g_ref: (group*W, group*s*W*s)   block-diagonal expansion matrix (resident)
    # o_ref: (tm, group*s*W*s)        lane-dense output slab
    o_ref[...] = jnp.dot(x_ref[...], g_ref[...],
                         preferred_element_type=jnp.float32).astype(o_ref.dtype)


# ----------------------------------------------------------------------------
# Sizing helpers.
# ----------------------------------------------------------------------------
def _round_up(x, m):
    return -(-x // m) * m


def _vmem_capacity_bytes():
    try:
        cap = int(pltpu.get_tpu_info().vmem_capacity_bytes)
        if cap > 0:
            return cap
    except Exception:
        pass
    return 64 * 1024 * 1024          # conservative (v7x-sized) fallback


def _pick_group(M, W, stride, gg_cap_bytes):
    """Largest group dividing M, preferring lane-dense in_w, Gg under the cap."""
    def gg_bytes(g):
        return 4 * (g * W) * (g * stride * W * stride)
    lane_ok = None
    any_ok = None
    for g in (8, 4, 2, 1):
        if M % g:
            continue
        if g > 1 and gg_bytes(g) > gg_cap_bytes:
            continue
        if any_ok is None:
            any_ok = g
        if lane_ok is None and (g * W) % 128 == 0:
            lane_ok = g
    if lane_ok is not None:
        return lane_ok
    if any_ok is not None:
        return any_ok
    return 1


def _choose_tiling(rows, in_w, out_w, vmem_limit_bytes, gg_bytes, out_bufs):
    """Pick (tm, grid). Masked tail allowed; >=2 even steps for non-tiny work."""
    pad = lambda w: _round_up(w, 128)
    out_bytes_total = rows * out_w * 4
    if rows <= 8 or out_bytes_total <= (2 << 20):
        # Tiny problem: one full-array block; fixed overheads dominate anyway.
        return rows, 1
    headroom = 2 << 20
    usable = max(1 << 20, vmem_limit_bytes - 2 * gg_bytes - headroom)
    bytes_per_row = 4 * (2 * pad(in_w) + out_bufs * pad(out_w))
    tm_budget = max(8, (usable // bytes_per_row) // 8 * 8)
    rows_pad = _round_up(rows, 8)
    nsteps = max(2, pl.cdiv(rows_pad, tm_budget))   # >= 2 steps (v7x 2 TCs)
    if nsteps % 2:
        nsteps += 1                                  # even step count for balance
    nsteps = max(1, min(nsteps, pl.cdiv(rows, 8)))   # tm >= 8
    tm = min(_round_up(pl.cdiv(rows, nsteps), 8), rows_pad)
    grid = pl.cdiv(rows, tm)
    return tm, grid


def _block_spec(shape, index_map, buffers=None):
    """BlockSpec with an optional buffer-count hint (graceful fallback)."""
    if buffers is not None and hasattr(pl, "Buffered"):
        try:
            return pl.BlockSpec(shape, index_map, pipeline_mode=pl.Buffered(buffers))
        except TypeError:
            pass
    return pl.BlockSpec(shape, index_map)


# ----------------------------------------------------------------------------
# Public wrapper.
# ----------------------------------------------------------------------------
def upsample_with_transposed_conv(x, stride=3):
    """x: [B, C, H, W] -> [B, C, H*stride, W*stride] (fixed depthwise deconv)."""
    B, C, H, W = x.shape
    Hs, Ws = H * stride, W * stride
    M = B * C * H                                     # total input rows

    cap = _vmem_capacity_bytes()
    big_vmem = cap >= (96 << 20)                      # v5e/v6e: 128 MiB; v7x: 64 MiB
    vmem_limit = (64 << 20) if big_vmem else (32 << 20)
    out_bufs = 3 if big_vmem else 2                   # extra writeback buffer on v5e/v6e

    group = _pick_group(M, W, stride, gg_cap_bytes=(4 << 20))
    in_w = group * W
    out_w = group * stride * Ws
    rows = M // group
    gg_bytes = 4 * in_w * out_w

    tm, grid_m = _choose_tiling(rows, in_w, out_w, vmem_limit, gg_bytes, out_bufs)

    Gg = jnp.asarray(_make_expansion_matrix(W, stride, group))   # jit constant
    x2 = x.reshape(rows, in_w)                                   # contiguous => free

    # Resident weight matrix; single-buffer it only when it is big enough to matter.
    w_spec = _block_spec((in_w, out_w), lambda i: (0, 0),
                         buffers=1 if gg_bytes > (2 << 20) else None)
    # Output is the roofline (9x input bytes); extra buffer only for real pipelines.
    o_spec = _block_spec((tm, out_w), lambda i: (i, 0),
                         buffers=out_bufs if (grid_m > 2 and out_bufs != 2) else None)

    out2 = pl.pallas_call(
        _upsample_kernel,
        out_shape=jax.ShapeDtypeStruct((rows, out_w), x.dtype),
        grid_spec=pltpu.PrefetchScalarGridSpec(
            num_scalar_prefetch=0,
            grid=(grid_m,),
            in_specs=[
                pl.BlockSpec((tm, in_w), lambda i: (i, 0)),
                w_spec,
            ],
            out_specs=o_spec,
        ),
        compiler_params=pltpu.CompilerParams(
            dimension_semantics=("parallel",),
            vmem_limit_bytes=vmem_limit,
        ),
    )(x2, Gg)

    return out2.reshape(B, C, Hs, Ws)                 # contiguous => free


# ----------------------------------------------------------------------------
# Pure-JAX reference (matches the PyTorch depthwise ConvTranspose2d exactly
# for kernel_size == stride, padding == 0).
# ----------------------------------------------------------------------------
def _reference(x, stride=3):
    filt = jnp.asarray(_make_bilinear_filt(stride))
    K = filt[:, None] * filt[None, :]
    B, C, H, W = x.shape
    y = x[:, :, :, None, :, None] * K[None, None, None, :, None, :]
    return y.reshape(B, C, H * stride, W * stride)


if __name__ == "__main__":
    stride = 3
    up = jax.jit(functools.partial(upsample_with_transposed_conv, stride=stride))

    # Primary small test (the module's canonical usage).
    key = jax.random.PRNGKey(0)
    B, C, H, W = 2, 4, 16, 16
    x = jax.random.normal(key, (B, C, H, W), dtype=jnp.float32)
    out = jax.block_until_ready(up(x))
    ref = _reference(x, stride=stride)
    assert out.shape == (B, C, H * stride, W * stride), out.shape
    assert jnp.allclose(out, ref, atol=1e-5, rtol=1e-5), "mismatch vs reference (primary)"

    # Secondary test: exercises the tiled, multi-step path with a masked tail block.
    B2, C2, H2, W2 = 2, 8, 250, 16
    x2 = jax.random.normal(jax.random.PRNGKey(0), (B2, C2, H2, W2), dtype=jnp.float32)
    out2 = jax.block_until_ready(up(x2))
    ref2 = _reference(x2, stride=stride)
    assert out2.shape == (B2, C2, H2 * stride, W2 * stride), out2.shape
    assert jnp.allclose(out2, ref2, atol=1e-5, rtol=1e-5), "mismatch vs reference (tiled)"

    # Third test: odd row count and non-lane-dense width (fallback group path).
    B3, C3, H3, W3 = 1, 3, 10, 20
    x3 = jax.random.normal(jax.random.PRNGKey(0), (B3, C3, H3, W3), dtype=jnp.float32)
    out3 = jax.block_until_ready(up(x3))
    ref3 = _reference(x3, stride=stride)
    assert out3.shape == (B3, C3, H3 * stride, W3 * stride), out3.shape
    assert jnp.allclose(out3, ref3, atol=1e-5, rtol=1e-5), "mismatch vs reference (odd)"

    print("KERNEL_OK")
</pallas_src>

<mosaic_0001>
module attributes {stable_mosaic.version = 11 : i64} {
  func.func @_upsample_kernel(%arg0: i32, %arg1: memref<16x128xf32, #tpu.memory_space<vmem>>, %arg2: memref<128x1152xf32, #tpu.memory_space<vmem>>, %arg3: memref<16x1152xf32, #tpu.memory_space<vmem>>) attributes {dimension_semantics = [#tpu.dimension_semantics<parallel>], iteration_bounds = array<i64: 1>, scalar_prefetch = 0 : i64, scratch_operands = 0 : i64, tpu.core_type = #tpu.core_type<tc>, window_params = [{transform_indices = @transform_0, window_bounds = array<i64: 16, 128>}, {pipeline_mode = #tpu.pipeline_mode<synchronous>, transform_indices = @transform_1, window_bounds = array<i64: 128, 1152>}, {transform_indices = @transform_2, window_bounds = array<i64: 16, 1152>}]} {
    %c0 = arith.constant 0 : index
    %c0_0 = arith.constant 0 : index
    %0 = vector.load %arg1[%c0, %c0_0] : memref<16x128xf32, #tpu.memory_space<vmem>>, vector<16x128xf32>
    %c0_1 = arith.constant 0 : index
    %c0_2 = arith.constant 0 : index
    %1 = vector.load %arg2[%c0_1, %c0_2] : memref<128x1152xf32, #tpu.memory_space<vmem>>, vector<128x1152xf32>
    %cst = arith.constant dense<0.000000e+00> : vector<16x1152xf32>
    %2 = tpu.matmul %0, %1, %cst {dimension_numbers = #tpu.dot_dimension_numbers<[1], [0], [0], [1], [0, 0, 1, 1], [], []>} : vector<16x128xf32>, vector<128x1152xf32>, vector<16x1152xf32> -> vector<16x1152xf32>
    %c0_3 = arith.constant 0 : index
    %c0_4 = arith.constant 0 : index
    %3 = vector.load %arg3[%c0_3, %c0_4] : memref<16x1152xf32, #tpu.memory_space<vmem>>, vector<16x1152xf32>
    tpu.vector_store %arg3[%c0_3, %c0_4], %2 {strides = array<i32>} : memref<16x1152xf32, #tpu.memory_space<vmem>>, vector<16x1152xf32>,
    return
  }
  func.func @transform_0(%arg0: i32) -> (i32, i32) {
    %c0_i32 = arith.constant 0 : i32
    %c0_i32_0 = arith.constant 0 : i32
    return %arg0, %c0_i32 : i32, i32
  }
  func.func @transform_1(%arg0: i32) -> (i32, i32) {
    %c0_i32 = arith.constant 0 : i32
    %c0_i32_0 = arith.constant 0 : i32
    %c0_i32_1 = arith.constant 0 : i32
    return %c0_i32, %c0_i32_0 : i32, i32
  }
  func.func @transform_2(%arg0: i32) -> (i32, i32) {
    %c0_i32 = arith.constant 0 : i32
    %c0_i32_0 = arith.constant 0 : i32
    return %arg0, %c0_i32 : i32, i32
  }
}

</mosaic_0001>

<llo_original>
// kernel: upsample_with_transposed_conv.1
$region0: #{upsample_with_transposed_conv.1}
  #allocation0 [shape = 'u32[]', space=smem, size = 0x4, offset = 0x4, fixed_abs, tag = 'smem constant byte address 0x4 - core index']
  #allocation1 [shape = 'u32[144,128]{1,0:T(1,128)}', space=vmem, size = 0x12000, scoped, tag = 'internal scratch']
  %s0 = inlined_call_operand.vmem [shape: f32[16,128], index: 0, kind: input, shape index: {}]
  %s1 = inlined_call_operand.hbm [shape: f32[128,1152], index: 1, kind: input, shape index: {}]
  %s2 = inlined_call_operand.vmem [shape: f32[16,1152], index: 2, kind: output, shape index: {}]
  %s3 = sld [smem:[#allocation0]]
  $region22: #{upsample_with_transposed_conv.1} parent=0
    _
  %s5 = ssub.s32 1, %s3
  %s6 = scalar_select 0, %s5, %s3
  $region1: #{upsample_with_transposed_conv.1} parent=0
    #allocation2 [shape = 'u8[589824]{0}', space=vmem, size = 0x90000, scoped, tag = 'input window, operand 1, single buffered']
    #allocation3 [shape = 's32[1]{0}', space=sflag, size = 0x4, scoped, tag = 'scoped memory for upsample_with_transposed_conv.1']
    %7 = vsyncpa [#allocation3], 0
    // Predicated region
    $region2: #{upsample_with_transposed_conv.1} parent=1 // pred_check
      _
    $region3: #{upsample_with_transposed_conv.1} parent=1 // pred_check_branch
      %9 = sbr.rel (0) target = $region5
    $region4: #{upsample_with_transposed_conv.1} parent=1 // pred_region
      _
    $region5: #{upsample_with_transposed_conv.1} parent=1 // pred_fallthru
      _
    // Predicated region
    $region6: #{upsample_with_transposed_conv.1} parent=1 // pred_check
      _
    $region7: #{upsample_with_transposed_conv.1} parent=1 // pred_check_branch
      %11 = sbr.rel (0) target = $region9
    $region8: #{upsample_with_transposed_conv.1} parent=1 // pred_region
      %s13 = ssub.s32 18432, 18432
      %14 = vsyncadd [#allocation3], %s13
      %s15 = sshll.u32 [#allocation2], 4
      %s16 = int_to_ptr.vmem [resolvable:$true] %s15
      %21 = dma.hbm_to_vmem [thread:$0]  %s1, 18432, %s16, [#allocation3], 1152, 1152, 72
    $region9: #{upsample_with_transposed_conv.1} parent=1 // pred_fallthru
      _
    // Predicated region
    $region10: #{upsample_with_transposed_conv.1} parent=1 // pred_check
      _
    $region11: #{upsample_with_transposed_conv.1} parent=1 // pred_check_branch
      %23 = sbr.rel (0) target = $region13
    $region12: #{upsample_with_transposed_conv.1} parent=1 // pred_region
      %24 = dma.done [#allocation3], 18432
    $region13: #{upsample_with_transposed_conv.1} parent=1 // pred_fallthru
      _
    %v25 = vld [vmem:[%s0] sm:$0xff]
    %v26 = vld [vmem:[%s0 + $0x8] sm:$0xff]
    %v27 = vld [vmem:[#allocation2] sm:$0xff]
    %v28 = vld [vmem:[#allocation2 + $0x8] sm:$0xff]
    %v29 = vld [vmem:[#allocation2 + $0x10] sm:$0xff]
    %v30 = vld [vmem:[#allocation2 + $0x18] sm:$0xff]
    %v31 = vld [vmem:[#allocation2 + $0x20] sm:$0xff]
    %v32 = vld [vmem:[#allocation2 + $0x28] sm:$0xff]
    %v33 = vld [vmem:[#allocation2 + $0x30] sm:$0xff]
    %v34 = vld [vmem:[#allocation2 + $0x38] sm:$0xff]
    %v35 = vld [vmem:[#allocation2 + $0x40] sm:$0xff]
    %v36 = vld [vmem:[#allocation2 + $0x48] sm:$0xff]
    %v37 = vld [vmem:[#allocation2 + $0x50] sm:$0xff]
    %v38 = vld [vmem:[#allocation2 + $0x58] sm:$0xff]
    %v39 = vld [vmem:[#allocation2 + $0x60] sm:$0xff]
    %v40 = vld [vmem:[#allocation2 + $0x68] sm:$0xff]
    %v41 = vld [vmem:[#allocation2 + $0x70] sm:$0xff]
    %v42 = vld [vmem:[#allocation2 + $0x78] sm:$0xff]
    %v43 = vld [vmem:[#allocation2 + $0x80] sm:$0xff]
    %v44 = vld [vmem:[#allocation2 + $0x88] sm:$0xff]
    %v45 = vld [vmem:[#allocation2 + $0x90] sm:$0xff]
    %v46 = vld [vmem:[#allocation2 + $0x98] sm:$0xff]
    %v47 = vld [vmem:[#allocation2 + $0xa0] sm:$0xff]
    %v48 = vld [vmem:[#allocation2 + $0xa8] sm:$0xff]
    %v49 = vld [vmem:[#allocation2 + $0xb0] sm:$0xff]
    %v50 = vld [vmem:[#allocation2 + $0xb8] sm:$0xff]
    %v51 = vld [vmem:[#allocation2 + $0xc0] sm:$0xff]
    %v52 = vld [vmem:[#allocation2 + $0xc8] sm:$0xff]
    %v53 = vld [vmem:[#allocation2 + $0xd0] sm:$0xff]
    %v54 = vld [vmem:[#allocation2 + $0xd8] sm:$0xff]
    %v55 = vld [vmem:[#allocation2 + $0xe0] sm:$0xff]
    %v56 = vld [vmem:[#allocation2 + $0xe8] sm:$0xff]
    %v57 = vld [vmem:[#allocation2 + $0xf0] sm:$0xff]
    %v58 = vld [vmem:[#allocation2 + $0xf8] sm:$0xff]
    %v59 = vld [vmem:[#allocation2 + $0x100] sm:$0xff]
    %v60 = vld [vmem:[#allocation2 + $0x108] sm:$0xff]
    %v61 = vld [vmem:[#allocation2 + $0x110] sm:$0xff]
    %v62 = vld [vmem:[#allocation2 + $0x118] sm:$0xff]
    %v63 = vld [vmem:[#allocation2 + $0x120] sm:$0xff]
    %v64 = vld [vmem:[#allocation2 + $0x128] sm:$0xff]
    %v65 = vld [vmem:[#allocation2 + $0x130] sm:$0xff]
    %v66 = vld [vmem:[#allocation2 + $0x138] sm:$0xff]
    %v67 = vld [vmem:[#allocation2 + $0x140] sm:$0xff]
    %v68 = vld [vmem:[#allocation2 + $0x148] sm:$0xff]
    %v69 = vld [vmem:[#allocation2 + $0x150] sm:$0xff]
    %v70 = vld [vmem:[#allocation2 + $0x158] sm:$0xff]
    %v71 = vld [vmem:[#allocation2 + $0x160] sm:$0xff]
    %v72 = vld [vmem:[#allocation2 + $0x168] sm:$0xff]
    %v73 = vld [vmem:[#allocation2 + $0x170] sm:$0xff]
    %v74 = vld [vmem:[#allocation2 + $0x178] sm:$0xff]
    %v75 = vld [vmem:[#allocation2 + $0x180] sm:$0xff]
    %v76 = vld [vmem:[#allocation2 + $0x188] sm:$0xff]
    %v77 = vld [vmem:[#allocation2 + $0x190] sm:$0xff]
    %v78 = vld [vmem:[#allocation2 + $0x198] sm:$0xff]
    %v79 = vld [vmem:[#allocation2 + $0x1a0] sm:$0xff]
    %v80 = vld [vmem:[#allocation2 + $0x1a8] sm:$0xff]
    %v81 = vld [vmem:[#allocation2 + $0x1b0] sm:$0xff]
    %v82 = vld [vmem:[#allocation2 + $0x1b8] sm:$0xff]
    %v83 = vld [vmem:[#allocation2 + $0x1c0] sm:$0xff]
    %v84 = vld [vmem:[#allocation2 + $0x1c8] sm:$0xff]
    %v85 = vld [vmem:[#allocation2 + $0x1d0] sm:$0xff]
    %v86 = vld [vmem:[#allocation2 + $0x1d8] sm:$0xff]
    %v87 = vld [vmem:[#allocation2 + $0x1e0] sm:$0xff]
    %v88 = vld [vmem:[#allocation2 + $0x1e8] sm:$0xff]
    %v89 = vld [vmem:[#allocation2 + $0x1f0] sm:$0xff]
    %v90 = vld [vmem:[#allocation2 + $0x1f8] sm:$0xff]
    %v91 = vld [vmem:[#allocation2 + $0x200] sm:$0xff]
    %v92 = vld [vmem:[#allocation2 + $0x208] sm:$0xff]
    %v93 = vld [vmem:[#allocation2 + $0x210] sm:$0xff]
    %v94 = vld [vmem:[#allocation2 + $0x218] sm:$0xff]
    %v95 = vld [vmem:[#allocation2 + $0x220] sm:$0xff]
    %v96 = vld [vmem:[#allocation2 + $0x228] sm:$0xff]
    %v97 = vld [vmem:[#allocation2 + $0x230] sm:$0xff]
    %v98 = vld [vmem:[#allocation2 + $0x238] sm:$0xff]
    %v99 = vld [vmem:[#allocation2 + $0x240] sm:$0xff]
    %v100 = vld [vmem:[#allocation2 + $0x248] sm:$0xff]
    %v101 = vld [vmem:[#allocation2 + $0x250] sm:$0xff]
    %v102 = vld [vmem:[#allocation2 + $0x258] sm:$0xff]
    %v103 = vld [vmem:[#allocation2 + $0x260] sm:$0xff]
    %v104 = vld [vmem:[#allocation2 + $0x268] sm:$0xff]
    %v105 = vld [vmem:[#allocation2 + $0x270] sm:$0xff]
    %v106 = vld [vmem:[#allocation2 + $0x278] sm:$0xff]
    %v107 = vld [vmem:[#allocation2 + $0x280] sm:$0xff]
    %v108 = vld [vmem:[#allocation2 + $0x288] sm:$0xff]
    %v109 = vld [vmem:[#allocation2 + $0x290] sm:$0xff]
    %v110 = vld [vmem:[#allocation2 + $0x298] sm:$0xff]
    %v111 = vld [vmem:[#allocation2 + $0x2a0] sm:$0xff]
    %v112 = vld [vmem:[#allocation2 + $0x2a8] sm:$0xff]
    %v113 = vld [vmem:[#allocation2 + $0x2b0] sm:$0xff]
    %v114 = vld [vmem:[#allocation2 + $0x2b8] sm:$0xff]
    %v115 = vld [vmem:[#allocation2 + $0x2c0] sm:$0xff]
    %v116 = vld [vmem:[#allocation2 + $0x2c8] sm:$0xff]
    %v117 = vld [vmem:[#allocation2 + $0x2d0] sm:$0xff]
    %v118 = vld [vmem:[#allocation2 + $0x2d8] sm:$0xff]
    %v119 = vld [vmem:[#allocation2 + $0x2e0] sm:$0xff]
    %v120 = vld [vmem:[#allocation2 + $0x2e8] sm:$0xff]
    %v121 = vld [vmem:[#allocation2 + $0x2f0] sm:$0xff]
    %v122 = vld [vmem:[#allocation2 + $0x2f8] sm:$0xff]
    %v123 = vld [vmem:[#allocation2 + $0x300] sm:$0xff]
    %v124 = vld [vmem:[#allocation2 + $0x308] sm:$0xff]
    %v125 = vld [vmem:[#allocation2 + $0x310] sm:$0xff]
    %v126 = vld [vmem:[#allocation2 + $0x318] sm:$0xff]
    %v127 = vld [vmem:[#allocation2 + $0x320] sm:$0xff]
    %v128 = vld [vmem:[#allocation2 + $0x328] sm:$0xff]
    %v129 = vld [vmem:[#allocation2 + $0x330] sm:$0xff]
    %v130 = vld [vmem:[#allocation2 + $0x338] sm:$0xff]
    %v131 = vld [vmem:[#allocation2 + $0x340] sm:$0xff]
    %v132 = vld [vmem:[#allocation2 + $0x348] sm:$0xff]
    %v133 = vld [vmem:[#allocation2 + $0x350] sm:$0xff]
    %v134 = vld [vmem:[#allocation2 + $0x358] sm:$0xff]
    %v135 = vld [vmem:[#allocation2 + $0x360] sm:$0xff]
    %v136 = vld [vmem:[#allocation2 + $0x368] sm:$0xff]
    %v137 = vld [vmem:[#allocation2 + $0x370] sm:$0xff]
    %v138 = vld [vmem:[#allocation2 + $0x378] sm:$0xff]
    %v139 = vld [vmem:[#allocation2 + $0x380] sm:$0xff]
    %v140 = vld [vmem:[#allocation2 + $0x388] sm:$0xff]
    %v141 = vld [vmem:[#allocation2 + $0x390] sm:$0xff]
    %v142 = vld [vmem:[#allocation2 + $0x398] sm:$0xff]
    %v143 = vld [vmem:[#allocation2 + $0x3a0] sm:$0xff]
    %v144 = vld [vmem:[#allocation2 + $0x3a8] sm:$0xff]
    %v145 = vld [vmem:[#allocation2 + $0x3b0] sm:$0xff]
    %v146 = vld [vmem:[#allocation2 + $0x3b8] sm:$0xff]
    %v147 = vld [vmem:[#allocation2 + $0x3c0] sm:$0xff]
    %v148 = vld [vmem:[#allocation2 + $0x3c8] sm:$0xff]
    %v149 = vld [vmem:[#allocation2 + $0x3d0] sm:$0xff]
    %v150 = vld [vmem:[#allocation2 + $0x3d8] sm:$0xff]
    %v151 = vld [vmem:[#allocation2 + $0x3e0] sm:$0xff]
    %v152 = vld [vmem:[#allocation2 + $0x3e8] sm:$0xff]
    %v153 = vld [vmem:[#allocation2 + $0x3f0] sm:$0xff]
    %v154 = vld [vmem:[#allocation2 + $0x3f8] sm:$0xff]
    %v155 = vld [vmem:[#allocation2 + $0x400] sm:$0xff]
    %v156 = vld [vmem:[#allocation2 + $0x408] sm:$0xff]
    %v157 = vld [vmem:[#allocation2 + $0x410] sm:$0xff]
    %v158 = vld [vmem:[#allocation2 + $0x418] sm:$0xff]
    %v159 = vld [vmem:[#allocation2 + $0x420] sm:$0xff]
    %v160 = vld [vmem:[#allocation2 + $0x428] sm:$0xff]
    %v161 = vld [vmem:[#allocation2 + $0x430] sm:$0xff]
    %v162 = vld [vmem:[#allocation2 + $0x438] sm:$0xff]
    %v163 = vld [vmem:[#allocation2 + $0x440] sm:$0xff]
    %v164 = vld [vmem:[#allocation2 + $0x448] sm:$0xff]
    %v165 = vld [vmem:[#allocation2 + $0x450] sm:$0xff]
    %v166 = vld [vmem:[#allocation2 + $0x458] sm:$0xff]
    %v167 = vld [vmem:[#allocation2 + $0x460] sm:$0xff]
    %v168 = vld [vmem:[#allocation2 + $0x468] sm:$0xff]
    %v169 = vld [vmem:[#allocation2 + $0x470] sm:$0xff]
    %v170 = vld [vmem:[#allocation2 + $0x478] sm:$0xff]
    %171 = vmatprep.subr.mxu0 %v163
    %172 = vmatpush1.msra.mxu0 %v162
    %173 = vmatprep.subr.mxu0 %v154
    %174 = vmatpush1.msra.mxu0 %v153
    %175 = vmatprep.subr.mxu0 %v145
    %176 = vmatpush1.msra.mxu0 %v144
    %177 = vmatprep.subr.mxu0 %v136
    %178 = vmatpush1.msra.mxu0 %v135
    %179 = vmatprep.subr.mxu0 %v127
    %180 = vmatpush1.msra.mxu0 %v126
    %181 = vmatprep.subr.mxu0 %v118
    %182 = vmatpush1.msra.mxu0 %v117
    %183 = vmatprep.subr.mxu0 %v109
    %184 = vmatpush1.msra.mxu0 %v108
    %185 = vmatprep.subr.mxu0 %v100
    %186 = vmatpush1.msra.mxu0 %v99
    %187 = vmatprep.subr.mxu0 %v91
    %188 = vmatpush1.msra.mxu0 %v90
    %189 = vmatprep.subr.mxu0 %v82
    %190 = vmatpush1.msra.mxu0 %v81
    %191 = vmatprep.subr.mxu0 %v73
    %192 = vmatpush1.msra.mxu0 %v72
    %193 = vmatprep.subr.mxu0 %v64
    %194 = vmatpush1.msra.mxu0 %v63
    %195 = vmatprep.subr.mxu0 %v55
    %196 = vmatpush1.msra.mxu0 %v54
    %197 = vmatprep.subr.mxu0 %v46
    %198 = vmatpush1.msra.mxu0 %v45
    %199 = vmatprep.subr.mxu0 %v37
    %200 = vmatpush1.msra.mxu0 %v36
    %201 = vmatprep.subr.mxu0 %v28
    %202 = vmatpush1.msra.mxu0 %v27
    %203 = vmatprep.subr.mxu0 0.0
    %204 = vmatpush2.msra.mxu0 0.0
    %205 = vmatprep.subr.mxu0 0.0
    %206 = vmatpush2.msra.mxu0 0.0
    %207 = vmatprep.subr.mxu0 0.0
    %208 = vmatpush2.msra.mxu0 0.0
    %209 = vmatprep.subr.mxu0 0.0
    %210 = vmatpush2.msra.mxu0 0.0
    %211 = vmatprep.subr.mxu0 0.0
    %212 = vmatpush2.msra.mxu0 0.0
    %213 = vmatprep.subr.mxu0 0.0
    %214 = vmatpush2.msra.mxu0 0.0
    %215 = vmatprep.subr.mxu0 0.0
    %216 = vmatpush2.msra.mxu0 0.0
    %217 = vmatprep.subr.mxu0 0.0
    %218 = vmatpush2.msra.mxu0 0.0
    %219 = vmatprep.subr.mxu0 0.0
    %220 = vmatpush2.msra.mxu0 0.0
    %221 = vmatprep.subr.mxu0 0.0
    %222 = vmatpush2.msra.mxu0 0.0
    %223 = vmatprep.subr.mxu0 0.0
    %224 = vmatpush2.msra.mxu0 0.0
    %225 = vmatprep.subr.mxu0 0.0
    %226 = vmatpush2.msra.mxu0 0.0
    %227 = vmatprep.subr.mxu0 0.0
    %228 = vmatpush2.msra.mxu0 0.0
    %229 = vmatprep.subr.mxu0 0.0
    %230 = vmatpush2.msra.mxu0 0.0
    %231 = vmatprep.subr.mxu0 0.0
    %232 = vmatpush2.msra.mxu0 0.0
    %233 = vmatprep.subr.mxu0 0.0
    %234 = vmatpush2.msra.mxu0 0.0
    %235 = vmatprep.mubr.f32.mxu0 0.0
    %236 = vmatmul.mubr.f32.gmra.mxu0 %v25
    %v237 = vpop.f32.mrf.mxu0
    %v238 = vadd.f32 0.0, %v237
    %v239 = vpop.f32.mrf.mxu0
    %v240 = vadd.f32 0.0, %v239
    %241 = vmatprep.mubr.f32.mxu0 0.0
    %242 = vmatmul.mubr.f32.gmra.mxu0 %v26
    %v243 = vpop.f32.mrf.mxu0
    %v244 = vadd.f32 0.0, %v243
    %v245 = vpop.f32.mrf.mxu0
    %v246 = vadd.f32 0.0, %v245
    %247 = vdwg.mxu0
    %248 = vmatprep.subr.mxu0 %v165
    %249 = vmatpush1.msra.mxu0 %v164
    %250 = vmatprep.subr.mxu0 %v156
    %251 = vmatpush1.msra.mxu0 %v155
    %252 = vmatprep.subr.mxu0 %v147
    %253 = vmatpush1.msra.mxu0 %v146
    %254 = vmatprep.subr.mxu0 %v138
    %255 = vmatpush1.msra.mxu0 %v137
    %256 = vmatprep.subr.mxu0 %v129
    %257 = vmatpush1.msra.mxu0 %v128
    %258 = vmatprep.subr.mxu0 %v120
    %259 = vmatpush1.msra.mxu0 %v119
    %260 = vmatprep.subr.mxu0 %v111
    %261 = vmatpush1.msra.mxu0 %v110
    %262 = vmatprep.subr.mxu0 %v102
    %263 = vmatpush1.msra.mxu0 %v101
    %264 = vmatprep.subr.mxu0 %v93
    %265 = vmatpush1.msra.mxu0 %v92
    %266 = vmatprep.subr.mxu0 %v84
    %267 = vmatpush1.msra.mxu0 %v83
    %268 = vmatprep.subr.mxu0 %v75
    %269 = vmatpush1.msra.mxu0 %v74
    %270 = vmatprep.subr.mxu0 %v66
    %271 = vmatpush1.msra.mxu0 %v65
    %272 = vmatprep.subr.mxu0 %v57
    %273 = vmatpush1.msra.mxu0 %v56
    %274 = vmatprep.subr.mxu0 %v48
    %275 = vmatpush1.msra.mxu0 %v47
    %276 = vmatprep.subr.mxu0 %v39
    %277 = vmatpush1.msra.mxu0 %v38
    %278 = vmatprep.subr.mxu0 %v30
    %279 = vmatpush1.msra.mxu0 %v29
    %280 = vmatprep.subr.mxu0 0.0
    %281 = vmatpush2.msra.mxu0 0.0
    %282 = vmatprep.subr.mxu0 0.0
    %283 = vmatpush2.msra.mxu0 0.0
    %284 = vmatprep.subr.mxu0 0.0
    %285 = vmatpush2.msra.mxu0 0.0
    %286 = vmatprep.subr.mxu0 0.0
    %287 = vmatpush2.msra.mxu0 0.0
    %288 = vmatprep.subr.mxu0 0.0
    %289 = vmatpush2.msra.mxu0 0.0
    %290 = vmatprep.subr.mxu0 0.0
    %291 = vmatpush2.msra.mxu0 0.0
    %292 = vmatprep.subr.mxu0 0.0
    %293 = vmatpush2.msra.mxu0 0.0
    %294 = vmatprep.subr.mxu0 0.0
    %295 = vmatpush2.msra.mxu0 0.0
    %296 = vmatprep.subr.mxu0 0.0
    %297 = vmatpush2.msra.mxu0 0.0
    %298 = vmatprep.subr.mxu0 0.0
    %299 = vmatpush2.msra.mxu0 0.0
    %300 = vmatprep.subr.mxu0 0.0
    %301 = vmatpush2.msra.mxu0 0.0
    %302 = vmatprep.subr.mxu0 0.0
    %303 = vmatpush2.msra.mxu0 0.0
    %304 = vmatprep.subr.mxu0 0.0
    %305 = vmatpush2.msra.mxu0 0.0
    %306 = vmatprep.subr.mxu0 0.0
    %307 = vmatpush2.msra.mxu0 0.0
    %308 = vmatprep.subr.mxu0 0.0
    %309 = vmatpush2.msra.mxu0 0.0
    %310 = vmatprep.subr.mxu0 0.0
    %311 = vmatpush2.msra.mxu0 0.0
    %312 = vmatprep.mubr.f32.mxu0 0.0
    %313 = vmatmul.mubr.f32.gmra.mxu0 %v25
    %v314 = vpop.f32.mrf.mxu0
    %v315 = vadd.f32 0.0, %v314
    %v316 = vpop.f32.mrf.mxu0
    %v317 = vadd.f32 0.0, %v316
    %318 = vmatprep.mubr.f32.mxu0 0.0
    %319 = vmatmul.mubr.f32.gmra.mxu0 %v26
    %v320 = vpop.f32.mrf.mxu0
    %v321 = vadd.f32 0.0, %v320
    %v322 = vpop.f32.mrf.mxu0
    %v323 = vadd.f32 0.0, %v322
    %324 = vdwg.mxu0
    %325 = vmatprep.subr.mxu0 %v167
    %326 = vmatpush1.msra.mxu0 %v166
    %327 = vmatprep.subr.mxu0 %v158
    %328 = vmatpush1.msra.mxu0 %v157
    %329 = vmatprep.subr.mxu0 %v149
    %330 = vmatpush1.msra.mxu0 %v148
    %331 = vmatprep.subr.mxu0 %v140
    %332 = vmatpush1.msra.mxu0 %v139
    %333 = vmatprep.subr.mxu0 %v131
    %334 = vmatpush1.msra.mxu0 %v130
    %335 = vmatprep.subr.mxu0 %v122
    %336 = vmatpush1.msra.mxu0 %v121
    %337 = vmatprep.subr.mxu0 %v113
    %338 = vmatpush1.msra.mxu0 %v112
    %339 = vmatprep.subr.mxu0 %v104
    %340 = vmatpush1.msra.mxu0 %v103
    %341 = vmatprep.subr.mxu0 %v95
    %342 = vmatpush1.msra.mxu0 %v94
    %343 = vmatprep.subr.mxu0 %v86
    %344 = vmatpush1.msra.mxu0 %v85
    %345 = vmatprep.subr.mxu0 %v77
    %346 = vmatpush1.msra.mxu0 %v76
    %347 = vmatprep.subr.mxu0 %v68
    %348 = vmatpush1.msra.mxu0 %v67
    %349 = vmatprep.subr.mxu0 %v59
    %350 = vmatpush1.msra.mxu0 %v58
    %351 = vmatprep.subr.mxu0 %v50
    %352 = vmatpush1.msra.mxu0 %v49
    %353 = vmatprep.subr.mxu0 %v41
    %354 = vmatpush1.msra.mxu0 %v40
    %355 = vmatprep.subr.mxu0 %v32
    %356 = vmatpush1.msra.mxu0 %v31
    %357 = vmatprep.subr.mxu0 0.0
    %358 = vmatpush2.msra.mxu0 0.0
    %359 = vmatprep.subr.mxu0 0.0
    %360 = vmatpush2.msra.mxu0 0.0
    %361 = vmatprep.subr.mxu0 0.0
    %362 = vmatpush2.msra.mxu0 0.0
    %363 = vmatprep.subr.mxu0 0.0
    %364 = vmatpush2.msra.mxu0 0.0
    %365 = vmatprep.subr.mxu0 0.0
    %366 = vmatpush2.msra.mxu0 0.0
    %367 = vmatprep.subr.mxu0 0.0
    %368 = vmatpush2.msra.mxu0 0.0
    %369 = vmatprep.subr.mxu0 0.0
    %370 = vmatpush2.msra.mxu0 0.0
    %371 = vmatprep.subr.mxu0 0.0
    %372 = vmatpush2.msra.mxu0 0.0
    %373 = vmatprep.subr.mxu0 0.0
    %374 = vmatpush2.msra.mxu0 0.0
    %375 = vmatprep.subr.mxu0 0.0
    %376 = vmatpush2.msra.mxu0 0.0
    %377 = vmatprep.subr.mxu0 0.0
    %378 = vmatpush2.msra.mxu0 0.0
    %379 = vmatprep.subr.mxu0 0.0
    %380 = vmatpush2.msra.mxu0 0.0
    %381 = vmatprep.subr.mxu0 0.0
    %382 = vmatpush2.msra.mxu0 0.0
    %383 = vmatprep.subr.mxu0 0.0
    %384 = vmatpush2.msra.mxu0 0.0
    %385 = vmatprep.subr.mxu0 0.0
    %386 = vmatpush2.msra.mxu0 0.0
    %387 = vmatprep.subr.mxu0 0.0
    %388 = vmatpush2.msra.mxu0 0.0
    %389 = vmatprep.mubr.f32.mxu0 0.0
    %390 = vmatmul.mubr.f32.gmra.mxu0 %v25
    %v391 = vpop.f32.mrf.mxu0
    %v392 = vadd.f32 0.0, %v391
    %v393 = vpop.f32.mrf.mxu0
    %v394 = vadd.f32 0.0, %v393
    %395 = vmatprep.mubr.f32.mxu0 0.0
    %396 = vmatmul.mubr.f32.gmra.mxu0 %v26
    %v397 = vpop.f32.mrf.mxu0
    %v398 = vadd.f32 0.0, %v397
    %v399 = vpop.f32.mrf.mxu0
    %v400 = vadd.f32 0.0, %v399
    %401 = vdwg.mxu0
    %402 = vmatprep.subr.mxu0 %v169
    %403 = vmatpush1.msra.mxu0 %v168
    %404 = vmatprep.subr.mxu0 %v160
    %405 = vmatpush1.msra.mxu0 %v159
    %406 = vmatprep.subr.mxu0 %v151
    %407 = vmatpush1.msra.mxu0 %v150
    %408 = vmatprep.subr.mxu0 %v142
    %409 = vmatpush1.msra.mxu0 %v141
    %410 = vmatprep.subr.mxu0 %v133
    %411 = vmatpush1.msra.mxu0 %v132
    %412 = vmatprep.subr.mxu0 %v124
    %413 = vmatpush1.msra.mxu0 %v123
    %414 = vmatprep.subr.mxu0 %v115
    %415 = vmatpush1.msra.mxu0 %v114
    %416 = vmatprep.subr.mxu0 %v106
    %417 = vmatpush1.msra.mxu0 %v105
    %418 = vmatprep.subr.mxu0 %v97
    %419 = vmatpush1.msra.mxu0 %v96
    %420 = vmatprep.subr.mxu0 %v88
    %421 = vmatpush1.msra.mxu0 %v87
    %422 = vmatprep.subr.mxu0 %v79
    %423 = vmatpush1.msra.mxu0 %v78
    %424 = vmatprep.subr.mxu0 %v70
    %425 = vmatpush1.msra.mxu0 %v69
    %426 = vmatprep.subr.mxu0 %v61
    %427 = vmatpush1.msra.mxu0 %v60
    %428 = vmatprep.subr.mxu0 %v52
    %429 = vmatpush1.msra.mxu0 %v51
    %430 = vmatprep.subr.mxu0 %v43
    %431 = vmatpush1.msra.mxu0 %v42
    %432 = vmatprep.subr.mxu0 %v34
    %433 = vmatpush1.msra.mxu0 %v33
    %434 = vmatprep.subr.mxu0 0.0
    %435 = vmatpush2.msra.mxu0 0.0
    %436 = vmatprep.subr.mxu0 0.0
    %437 = vmatpush2.msra.mxu0 0.0
    %438 = vmatprep.subr.mxu0 0.0
    %439 = vmatpush2.msra.mxu0 0.0
    %440 = vmatprep.subr.mxu0 0.0
    %441 = vmatpush2.msra.mxu0 0.0
    %442 = vmatprep.subr.mxu0 0.0
    %443 = vmatpush2.msra.mxu0 0.0
    %444 = vmatprep.subr.mxu0 0.0
    %445 = vmatpush2.msra.mxu0 0.0
    %446 = vmatprep.subr.mxu0 0.0
    %447 = vmatpush2.msra.mxu0 0.0
    %448 = vmatprep.subr.mxu0 0.0
    %449 = vmatpush2.msra.mxu0 0.0
    %450 = vmatprep.subr.mxu0 0.0
    %451 = vmatpush2.msra.mxu0 0.0
    %452 = vmatprep.subr.mxu0 0.0
    %453 = vmatpush2.msra.mxu0 0.0
    %454 = vmatprep.subr.mxu0 0.0
    %455 = vmatpush2.msra.mxu0 0.0
    %456 = vmatprep.subr.mxu0 0.0
    %457 = vmatpush2.msra.mxu0 0.0
    %458 = vmatprep.subr.mxu0 0.0
    %459 = vmatpush2.msra.mxu0 0.0
    %460 = vmatprep.subr.mxu0 0.0
    %461 = vmatpush2.msra.mxu0 0.0
    %462 = vmatprep.subr.mxu0 0.0
    %463 = vmatpush2.msra.mxu0 0.0
    %464 = vmatprep.subr.mxu0 0.0
    %465 = vmatpush2.msra.mxu0 0.0
    %466 = vmatprep.mubr.f32.mxu0 0.0
    %467 = vmatmul.mubr.f32.gmra.mxu0 %v25
    %v468 = vpop.f32.mrf.mxu0
    %v469 = vadd.f32 0.0, %v468
    %v470 = vpop.f32.mrf.mxu0
    %v471 = vadd.f32 0.0, %v470
    %472 = vmatprep.mubr.f32.mxu0 0.0
    %473 = vmatmul.mubr.f32.gmra.mxu0 %v26
    %v474 = vpop.f32.mrf.mxu0
    %v475 = vadd.f32 0.0, %v474
    %v476 = vpop.f32.mrf.mxu0
    %v477 = vadd.f32 0.0, %v476
    %478 = vdwg.mxu0
    %479 = vmatprep.subr.mxu0 0.0
    %480 = vmatpush1.msra.mxu0 %v170
    %481 = vmatprep.subr.mxu0 0.0
    %482 = vmatpush1.msra.mxu0 %v161
    %483 = vmatprep.subr.mxu0 0.0
    %484 = vmatpush1.msra.mxu0 %v152
    %485 = vmatprep.subr.mxu0 0.0
    %486 = vmatpush1.msra.mxu0 %v143
    %487 = vmatprep.subr.mxu0 0.0
    %488 = vmatpush1.msra.mxu0 %v134
    %489 = vmatprep.subr.mxu0 0.0
    %490 = vmatpush1.msra.mxu0 %v125
    %491 = vmatprep.subr.mxu0 0.0
    %492 = vmatpush1.msra.mxu0 %v116
    %493 = vmatprep.subr.mxu0 0.0
    %494 = vmatpush1.msra.mxu0 %v107
    %495 = vmatprep.subr.mxu0 0.0
    %496 = vmatpush1.msra.mxu0 %v98
    %497 = vmatprep.subr.mxu0 0.0
    %498 = vmatpush1.msra.mxu0 %v89
    %499 = vmatprep.subr.mxu0 0.0
    %500 = vmatpush1.msra.mxu0 %v80
    %501 = vmatprep.subr.mxu0 0.0
    %502 = vmatpush1.msra.mxu0 %v71
    %503 = vmatprep.subr.mxu0 0.0
    %504 = vmatpush1.msra.mxu0 %v62
    %505 = vmatprep.subr.mxu0 0.0
    %506 = vmatpush1.msra.mxu0 %v53
    %507 = vmatprep.subr.mxu0 0.0
    %508 = vmatpush1.msra.mxu0 %v44
    %509 = vmatprep.subr.mxu0 0.0
    %510 = vmatpush1.msra.mxu0 %v35
    %511 = vmatprep.subr.mxu0 0.0
    %512 = vmatpush2.msra.mxu0 0.0
    %513 = vmatprep.subr.mxu0 0.0
    %514 = vmatpush2.msra.mxu0 0.0
    %515 = vmatprep.subr.mxu0 0.0
    %516 = vmatpush2.msra.mxu0 0.0
    %517 = vmatprep.subr.mxu0 0.0
    %518 = vmatpush2.msra.mxu0 0.0
    %519 = vmatprep.subr.mxu0 0.0
    %520 = vmatpush2.msra.mxu0 0.0
    %521 = vmatprep.subr.mxu0 0.0
    %522 = vmatpush2.msra.mxu0 0.0
    %523 = vmatprep.subr.mxu0 0.0
    %524 = vmatpush2.msra.mxu0 0.0
    %525 = vmatprep.subr.mxu0 0.0
    %526 = vmatpush2.msra.mxu0 0.0
    %527 = vmatprep.subr.mxu0 0.0
    %528 = vmatpush2.msra.mxu0 0.0
    %529 = vmatprep.subr.mxu0 0.0
    %530 = vmatpush2.msra.mxu0 0.0
    %531 = vmatprep.subr.mxu0 0.0
    %532 = vmatpush2.msra.mxu0 0.0
    %533 = vmatprep.subr.mxu0 0.0
    %534 = vmatpush2.msra.mxu0 0.0
    %535 = vmatprep.subr.mxu0 0.0
    %536 = vmatpush2.msra.mxu0 0.0
    %537 = vmatprep.subr.mxu0 0.0
    %538 = vmatpush2.msra.mxu0 0.0
    %539 = vmatprep.subr.mxu0 0.0
    %540 = vmatpush2.msra.mxu0 0.0
    %541 = vmatprep.subr.mxu0 0.0
    %542 = vmatpush2.msra.mxu0 0.0
    %543 = vmatprep.mubr.f32.mxu0 0.0
    %544 = vmatmul.mubr.f32.gmra.mxu0 %v25
    %v545 = vpop.f32.mrf.mxu0
    %v546 = vadd.f32 0.0, %v545
    %v547 = vpop.f32.mrf.mxu0
    %548 = vmatprep.mubr.f32.mxu0 0.0
    %549 = vmatmul.mubr.f32.gmra.mxu0 %v26
    %v550 = vpop.f32.mrf.mxu0
    %v551 = vadd.f32 0.0, %v550
    %v552 = vpop.f32.mrf.mxu0
    %553 = vdwg.mxu0
    %554 = vst [vmem:[%s2] sm:$0xff] %v238
    %555 = vst [vmem:[%s2 + $0x8] sm:$0xff] %v240
    %556 = vst [vmem:[%s2 + $0x10] sm:$0xff] %v315
    %557 = vst [vmem:[%s2 + $0x18] sm:$0xff] %v317
    %558 = vst [vmem:[%s2 + $0x20] sm:$0xff] %v392
    %559 = vst [vmem:[%s2 + $0x28] sm:$0xff] %v394
    %560 = vst [vmem:[%s2 + $0x30] sm:$0xff] %v469
    %561 = vst [vmem:[%s2 + $0x38] sm:$0xff] %v471
    %562 = vst [vmem:[%s2 + $0x40] sm:$0xff] %v546
    %563 = vst [vmem:[%s2 + $0x48] sm:$0xff] %v244
    %564 = vst [vmem:[%s2 + $0x50] sm:$0xff] %v246
    %565 = vst [vmem:[%s2 + $0x58] sm:$0xff] %v321
    %566 = vst [vmem:[%s2 + $0x60] sm:$0xff] %v323
    %567 = vst [vmem:[%s2 + $0x68] sm:$0xff] %v398
    %568 = vst [vmem:[%s2 + $0x70] sm:$0xff] %v400
    %569 = vst [vmem:[%s2 + $0x78] sm:$0xff] %v475
    %570 = vst [vmem:[%s2 + $0x80] sm:$0xff] %v477
    %571 = vst [vmem:[%s2 + $0x88] sm:$0xff] %v551
    // Predicated region
    $region14: #{upsample_with_transposed_conv.1} parent=1 // pred_check
      _
    $region15: #{upsample_with_transposed_conv.1} parent=1 // pred_check_branch
      %573 = sbr.rel (0) target = $region17
    $region16: #{upsample_with_transposed_conv.1} parent=1 // pred_region
      _
    $region17: #{upsample_with_transposed_conv.1} parent=1 // pred_fallthru
      _
    // Predicated region
    $region18: #{upsample_with_transposed_conv.1} parent=1 // pred_check
      _
    $region19: #{upsample_with_transposed_conv.1} parent=1 // pred_check_branch
      %575 = sbr.rel (0) target = $region21
    $region20: #{upsample_with_transposed_conv.1} parent=1 // pred_region
      _
    $region21: #{upsample_with_transposed_conv.1} parent=1 // pred_fallthru
      _
    %576 = vsyncpa [#allocation3], 1

</llo_original>
